<compile_context>
chip_gen: v5e
topology: v5e:2x2
jax: 0.10.0
libtpu: 0.0.40
codegen_flags: <defaults>
</compile_context>

<pallas_src>
import math

import numpy as np
import jax
import jax.numpy as jnp
from jax.experimental import pallas as pl
from jax.experimental.pallas import tpu as pltpu

# ---- model hyper-parameters (small, consistent with the module) ----
D_MODEL = 32
D_FF    = 64
N_HEADS = 4
D_K     = D_MODEL // N_HEADS
EPS     = 1e-6
NEG_INF = -1e9


# ----------------------------- fused encoder-layer kernel ------------------------------

def _encoder_layer_kernel(x_ref, bias_ref,
                          ln1a_ref, ln1b_ref,
                          wqkv_ref, bqkv_ref, wo_ref, bo_ref,
                          ln2a_ref, ln2b_ref,
                          w1_ref, b1_ref, w2_ref, b2_ref,
                          o_ref):
    x = x_ref[0]            # (L, D)   one batch element
    bias = bias_ref[0]      # (L, L)   additive mask bias (0 or -1e9)

    def layer_norm(v, a, b):
        # Annotated-Transformer LayerNorm: torch.std is unbiased (ddof=1); eps added to std.
        mean = jnp.mean(v, axis=-1, keepdims=True)
        c = v - mean
        std = jnp.sqrt(jnp.sum(c * c, axis=-1, keepdims=True) * (1.0 / (D_MODEL - 1)))
        return a * c * pl.reciprocal(std + EPS, approx=True) + b

    # ---- sublayer 0: pre-norm self-attention + residual (dropout = identity) ----
    xn = layer_norm(x, ln1a_ref[...], ln1b_ref[...])
    qkv = jnp.dot(xn, wqkv_ref[...], preferred_element_type=jnp.float32) + bqkv_ref[...]
    q = qkv[:, :D_MODEL] * (1.0 / math.sqrt(D_K))        # fold 1/sqrt(d_k) into Q
    k = qkv[:, D_MODEL:2 * D_MODEL]
    v = qkv[:, 2 * D_MODEL:]

    ctx_heads = []
    for h in range(N_HEADS):                              # static unroll, all in-VMEM
        sl = slice(h * D_K, (h + 1) * D_K)
        qh, kh, vh = q[:, sl], k[:, sl], v[:, sl]
        s = jnp.dot(qh, kh.T, preferred_element_type=jnp.float32) + bias
        s = s - jnp.max(s, axis=-1, keepdims=True)        # stable softmax
        p = jnp.exp(s)
        p = p * pl.reciprocal(jnp.sum(p, axis=-1, keepdims=True), approx=True)
        ctx_heads.append(jnp.dot(p, vh, preferred_element_type=jnp.float32))
    ctx = jnp.concatenate(ctx_heads, axis=-1)              # (L, D)

    attn_out = jnp.dot(ctx, wo_ref[...], preferred_element_type=jnp.float32) + bo_ref[...]
    x1 = x + attn_out

    # ---- sublayer 1: pre-norm FFN + residual (dropout = identity) ----
    xn2 = layer_norm(x1, ln2a_ref[...], ln2b_ref[...])
    hdn = jnp.dot(xn2, w1_ref[...], preferred_element_type=jnp.float32) + b1_ref[...]
    hdn = jnp.maximum(hdn, 0.0)
    ffn = jnp.dot(hdn, w2_ref[...], preferred_element_type=jnp.float32) + b2_ref[...]
    o_ref[0] = x1 + ffn


@jax.jit
def encoder_layer_forward(params, x, mask):
    """EncoderLayer.forward(x, mask).  x: (B, L, D) f32; mask: (B, 1, L) 0/1."""
    B, L, D = x.shape
    # Precompute additive attention bias once (equivalent to masked_fill(mask==0, -1e9)).
    bias = jnp.where(jnp.broadcast_to(mask, (B, L, L)) == 0,
                     jnp.float32(NEG_INF), jnp.float32(0.0))

    def full_spec(shape):
        nd = len(shape)
        return pl.BlockSpec(shape, lambda b, _nd=nd: (0,) * _nd)

    return pl.pallas_call(
        _encoder_layer_kernel,
        out_shape=jax.ShapeDtypeStruct((B, L, D), jnp.float32),
        grid=(B,),
        in_specs=[
            pl.BlockSpec((1, L, D), lambda b: (b, 0, 0)),   # x
            pl.BlockSpec((1, L, L), lambda b: (b, 0, 0)),   # mask bias
            full_spec((1, D)), full_spec((1, D)),           # ln1 a, b
            full_spec((D, 3 * D)), full_spec((1, 3 * D)),   # fused Wqkv, bqkv
            full_spec((D, D)), full_spec((1, D)),           # Wo, bo
            full_spec((1, D)), full_spec((1, D)),           # ln2 a, b
            full_spec((D, D_FF)), full_spec((1, D_FF)),     # ffn W1, b1
            full_spec((D_FF, D)), full_spec((1, D)),        # ffn W2, b2
        ],
        out_specs=pl.BlockSpec((1, L, D), lambda b: (b, 0, 0)),
        compiler_params=pltpu.CompilerParams(
            dimension_semantics=("parallel",)),             # v7x: one batch elem per TC
    )(x, bias,
      params["ln1_a"], params["ln1_b"],
      params["wqkv"], params["bqkv"], params["wo"], params["bo"],
      params["ln2_a"], params["ln2_b"],
      params["w1"], params["b1"], params["w2"], params["b2"])


# ----------------------------- pure-JAX reference (for validation) ------------------------------

def reference_encoder_layer(p, x, mask):
    def ln(v, a, b):
        mean = jnp.mean(v, -1, keepdims=True)
        c = v - mean
        std = jnp.sqrt(jnp.sum(c * c, -1, keepdims=True) / (v.shape[-1] - 1))
        return a * c / (std + EPS) + b

    B, L, D = x.shape
    xn = ln(x, p["ln1_a"][0], p["ln1_b"][0])
    qkv = xn @ p["wqkv"] + p["bqkv"][0]
    q, k, v = qkv[..., :D], qkv[..., D:2 * D], qkv[..., 2 * D:]

    def split(t):
        return t.reshape(B, L, N_HEADS, D_K).transpose(0, 2, 1, 3)

    q, k, v = split(q), split(k), split(v)
    scores = jnp.einsum("bhqd,bhkd->bhqk", q, k) / math.sqrt(D_K)
    m = jnp.broadcast_to(mask[:, None, :, :], scores.shape)
    scores = jnp.where(m == 0, NEG_INF, scores)
    attn = jax.nn.softmax(scores, axis=-1)
    ctx = jnp.einsum("bhqk,bhkd->bhqd", attn, v).transpose(0, 2, 1, 3).reshape(B, L, D)
    x1 = x + ctx @ p["wo"] + p["bo"][0]
    xn2 = ln(x1, p["ln2_a"][0], p["ln2_b"][0])
    h = jax.nn.relu(xn2 @ p["w1"] + p["b1"][0])
    return x1 + h @ p["w2"] + p["b2"][0]


# ----------------------------- deterministic init ------------------------------

def init_params(key):
    ks = jax.random.split(key, 8)

    def dense(k, din, dout):
        return jax.random.normal(k, (din, dout), jnp.float32) / math.sqrt(din)

    def bias(k, n):
        return 0.1 * jax.random.normal(k, (1, n), jnp.float32)

    return dict(
        ln1_a=jnp.ones((1, D_MODEL), jnp.float32),
        ln1_b=jnp.zeros((1, D_MODEL), jnp.float32),
        wqkv=dense(ks[0], D_MODEL, 3 * D_MODEL),   # fused Q|K|V projection
        bqkv=bias(ks[1], 3 * D_MODEL),
        wo=dense(ks[2], D_MODEL, D_MODEL),
        bo=bias(ks[3], D_MODEL),
        ln2_a=jnp.ones((1, D_MODEL), jnp.float32),
        ln2_b=jnp.zeros((1, D_MODEL), jnp.float32),
        w1=dense(ks[4], D_MODEL, D_FF),
        b1=bias(ks[5], D_FF),
        w2=dense(ks[6], D_FF, D_MODEL),
        b2=bias(ks[7], D_MODEL),
    )


# ----------------------------- main ------------------------------

if __name__ == "__main__":
    key = jax.random.PRNGKey(0)
    kx, kp = jax.random.split(key)

    B, L = 2, 8
    params = init_params(kp)
    x = jax.random.normal(kx, (B, L, D_MODEL), jnp.float32)

    # padding mask: second sequence has its last 2 positions masked
    lengths = jnp.array([L, L - 2], jnp.int32)
    mask = (jnp.arange(L)[None, :] < lengths[:, None]).astype(jnp.float32)[:, None, :]  # (B,1,L)

    out = encoder_layer_forward(params, x, mask)
    out = jax.block_until_ready(out)

    assert out.shape == (B, L, D_MODEL) and out.dtype == jnp.float32
    ref = reference_encoder_layer(params, x, mask)
    np.testing.assert_allclose(np.asarray(out), np.asarray(ref), rtol=2e-2, atol=2e-2)

    # TODO(synk): nn.Dropout is identity here (eval mode); training-mode dropout not implemented.
    print("KERNEL_OK")
</pallas_src>

<mosaic_0001>
module attributes {stable_mosaic.version = 11 : i64} {
  func.func @_encoder_layer_kernel(%arg0: i32, %arg1: memref<1x8x32xf32, #tpu.memory_space<vmem>>, %arg2: memref<1x8x8xf32, #tpu.memory_space<vmem>>, %arg3: memref<1x32xf32, #tpu.memory_space<vmem>>, %arg4: memref<1x32xf32, #tpu.memory_space<vmem>>, %arg5: memref<32x96xf32, #tpu.memory_space<vmem>>, %arg6: memref<1x96xf32, #tpu.memory_space<vmem>>, %arg7: memref<32x32xf32, #tpu.memory_space<vmem>>, %arg8: memref<1x32xf32, #tpu.memory_space<vmem>>, %arg9: memref<1x32xf32, #tpu.memory_space<vmem>>, %arg10: memref<1x32xf32, #tpu.memory_space<vmem>>, %arg11: memref<32x64xf32, #tpu.memory_space<vmem>>, %arg12: memref<1x64xf32, #tpu.memory_space<vmem>>, %arg13: memref<64x32xf32, #tpu.memory_space<vmem>>, %arg14: memref<1x32xf32, #tpu.memory_space<vmem>>, %arg15: memref<1x8x32xf32, #tpu.memory_space<vmem>>) attributes {dimension_semantics = [#tpu.dimension_semantics<parallel>], iteration_bounds = array<i64: 2>, scalar_prefetch = 0 : i64, scratch_operands = 0 : i64, tpu.core_type = #tpu.core_type<tc>, window_params = [{transform_indices = @transform_0, window_bounds = array<i64: 1, 8, 32>}, {transform_indices = @transform_1, window_bounds = array<i64: 1, 8, 8>}, {pipeline_mode = #tpu.pipeline_mode<synchronous>, transform_indices = @transform_2, window_bounds = array<i64: 1, 32>}, {pipeline_mode = #tpu.pipeline_mode<synchronous>, transform_indices = @transform_3, window_bounds = array<i64: 1, 32>}, {pipeline_mode = #tpu.pipeline_mode<synchronous>, transform_indices = @transform_4, window_bounds = array<i64: 32, 96>}, {pipeline_mode = #tpu.pipeline_mode<synchronous>, transform_indices = @transform_5, window_bounds = array<i64: 1, 96>}, {pipeline_mode = #tpu.pipeline_mode<synchronous>, transform_indices = @transform_6, window_bounds = array<i64: 32, 32>}, {pipeline_mode = #tpu.pipeline_mode<synchronous>, transform_indices = @transform_7, window_bounds = array<i64: 1, 32>}, {pipeline_mode = #tpu.pipeline_mode<synchronous>, transform_indices = @transform_8, window_bounds = array<i64: 1, 32>}, {pipeline_mode = #tpu.pipeline_mode<synchronous>, transform_indices = @transform_9, window_bounds = array<i64: 1, 32>}, {pipeline_mode = #tpu.pipeline_mode<synchronous>, transform_indices = @transform_10, window_bounds = array<i64: 32, 64>}, {pipeline_mode = #tpu.pipeline_mode<synchronous>, transform_indices = @transform_11, window_bounds = array<i64: 1, 64>}, {pipeline_mode = #tpu.pipeline_mode<synchronous>, transform_indices = @transform_12, window_bounds = array<i64: 64, 32>}, {pipeline_mode = #tpu.pipeline_mode<synchronous>, transform_indices = @transform_13, window_bounds = array<i64: 1, 32>}, {transform_indices = @transform_14, window_bounds = array<i64: 1, 8, 32>}]} {
    %c0 = arith.constant 0 : index
    %c0_0 = arith.constant 0 : index
    %c0_1 = arith.constant 0 : index
    %0 = vector.load %arg1[%c0, %c0_0, %c0_1] : memref<1x8x32xf32, #tpu.memory_space<vmem>>, vector<1x8x32xf32>
    %1 = vector.shape_cast %0 : vector<1x8x32xf32> to vector<8x32xf32>
    %c0_2 = arith.constant 0 : index
    %c0_3 = arith.constant 0 : index
    %c0_4 = arith.constant 0 : index
    %2 = vector.load %arg2[%c0_2, %c0_3, %c0_4] : memref<1x8x8xf32, #tpu.memory_space<vmem>>, vector<1x8x8xf32>
    %3 = vector.shape_cast %2 : vector<1x8x8xf32> to vector<8x8xf32>
    %c0_5 = arith.constant 0 : index
    %c0_6 = arith.constant 0 : index
    %4 = vector.load %arg3[%c0_5, %c0_6] : memref<1x32xf32, #tpu.memory_space<vmem>>, vector<1x32xf32>
    %c0_7 = arith.constant 0 : index
    %c0_8 = arith.constant 0 : index
    %5 = vector.load %arg4[%c0_7, %c0_8] : memref<1x32xf32, #tpu.memory_space<vmem>>, vector<1x32xf32>
    %cst = arith.constant dense<0.000000e+00> : vector<8xf32>
    %6 = vector.multi_reduction <add>, %1, %cst [1] : vector<8x32xf32> to vector<8xf32>
    %7 = vector.shape_cast %6 : vector<8xf32> to vector<8x1xf32>
    %cst_9 = arith.constant 3.200000e+01 : f32
    %8 = vector.broadcast %cst_9 : f32 to vector<8x1xf32>
    %9 = arith.divf %7, %8 : vector<8x1xf32>
    %10 = vector.broadcast %9 : vector<8x1xf32> to vector<8x32xf32>
    %11 = arith.subf %1, %10 : vector<8x32xf32>
    %12 = arith.mulf %11, %11 : vector<8x32xf32>
    %cst_10 = arith.constant dense<0.000000e+00> : vector<8xf32>
    %13 = vector.multi_reduction <add>, %12, %cst_10 [1] : vector<8x32xf32> to vector<8xf32>
    %14 = vector.shape_cast %13 : vector<8xf32> to vector<8x1xf32>
    %cst_11 = arith.constant 0.0322580636 : f32
    %15 = vector.broadcast %cst_11 : f32 to vector<8x1xf32>
    %16 = arith.mulf %14, %15 : vector<8x1xf32>
    %17 = math.sqrt %16 : vector<8x1xf32>
    %18 = vector.broadcast %4 : vector<1x32xf32> to vector<8x32xf32>
    %19 = arith.mulf %18, %11 : vector<8x32xf32>
    %cst_12 = arith.constant 9.99999997E-7 : f32
    %20 = vector.broadcast %cst_12 : f32 to vector<8x1xf32>
    %21 = arith.addf %17, %20 : vector<8x1xf32>
    %22 = tpu.reciprocal %21 {approx = true} : vector<8x1xf32> -> vector<8x1xf32>
    %23 = vector.broadcast %22 : vector<8x1xf32> to vector<8x32xf32>
    %24 = arith.mulf %19, %23 : vector<8x32xf32>
    %25 = vector.broadcast %5 : vector<1x32xf32> to vector<8x32xf32>
    %26 = arith.addf %24, %25 : vector<8x32xf32>
    %c0_13 = arith.constant 0 : index
    %c0_14 = arith.constant 0 : index
    %27 = vector.load %arg5[%c0_13, %c0_14] : memref<32x96xf32, #tpu.memory_space<vmem>>, vector<32x96xf32>
    %cst_15 = arith.constant dense<0.000000e+00> : vector<8x96xf32>
    %28 = tpu.matmul %26, %27, %cst_15 {dimension_numbers = #tpu.dot_dimension_numbers<[1], [0], [0], [1], [0, 0, 1, 1], [], []>} : vector<8x32xf32>, vector<32x96xf32>, vector<8x96xf32> -> vector<8x96xf32>
    %c0_16 = arith.constant 0 : index
    %c0_17 = arith.constant 0 : index
    %29 = vector.load %arg6[%c0_16, %c0_17] : memref<1x96xf32, #tpu.memory_space<vmem>>, vector<1x96xf32>
    %30 = vector.broadcast %29 : vector<1x96xf32> to vector<8x96xf32>
    %31 = arith.addf %28, %30 : vector<8x96xf32>
    %32 = vector.extract_strided_slice %31 {offsets = [0, 0], sizes = [8, 32], strides = [1, 1]} : vector<8x96xf32> to vector<8x32xf32>
    %cst_18 = arith.constant 0.353553385 : f32
    %33 = vector.broadcast %cst_18 : f32 to vector<8x32xf32>
    %34 = arith.mulf %32, %33 : vector<8x32xf32>
    %35 = vector.extract_strided_slice %31 {offsets = [0, 32], sizes = [8, 32], strides = [1, 1]} : vector<8x96xf32> to vector<8x32xf32>
    %36 = vector.extract_strided_slice %31 {offsets = [0, 64], sizes = [8, 32], strides = [1, 1]} : vector<8x96xf32> to vector<8x32xf32>
    %37 = vector.extract_strided_slice %34 {offsets = [0, 0], sizes = [8, 8], strides = [1, 1]} : vector<8x32xf32> to vector<8x8xf32>
    %38 = vector.extract_strided_slice %35 {offsets = [0, 0], sizes = [8, 8], strides = [1, 1]} : vector<8x32xf32> to vector<8x8xf32>
    %39 = vector.extract_strided_slice %36 {offsets = [0, 0], sizes = [8, 8], strides = [1, 1]} : vector<8x32xf32> to vector<8x8xf32>
    %40 = tpu.transpose %38, [1, 0] : vector<8x8xf32> -> vector<8x8xf32>
    %cst_19 = arith.constant dense<0.000000e+00> : vector<8x8xf32>
    %41 = tpu.matmul %37, %40, %cst_19 {dimension_numbers = #tpu.dot_dimension_numbers<[1], [0], [0], [1], [0, 0, 1, 1], [], []>} : vector<8x8xf32>, vector<8x8xf32>, vector<8x8xf32> -> vector<8x8xf32>
    %42 = arith.addf %41, %3 : vector<8x8xf32>
    %cst_20 = arith.constant dense<0xFF800000> : vector<8xf32>
    %43 = vector.multi_reduction <maximumf>, %42, %cst_20 [1] : vector<8x8xf32> to vector<8xf32>
    %44 = vector.shape_cast %43 : vector<8xf32> to vector<8x1xf32>
    %45 = vector.broadcast %44 : vector<8x1xf32> to vector<8x8xf32>
    %46 = arith.subf %42, %45 : vector<8x8xf32>
    %47 = math.exp %46 : vector<8x8xf32>
    %cst_21 = arith.constant dense<0.000000e+00> : vector<8xf32>
    %48 = vector.multi_reduction <add>, %47, %cst_21 [1] : vector<8x8xf32> to vector<8xf32>
    %49 = vector.shape_cast %48 : vector<8xf32> to vector<8x1xf32>
    %50 = tpu.reciprocal %49 {approx = true} : vector<8x1xf32> -> vector<8x1xf32>
    %51 = vector.broadcast %50 : vector<8x1xf32> to vector<8x8xf32>
    %52 = arith.mulf %47, %51 : vector<8x8xf32>
    %cst_22 = arith.constant dense<0.000000e+00> : vector<8x8xf32>
    %53 = tpu.matmul %52, %39, %cst_22 {dimension_numbers = #tpu.dot_dimension_numbers<[1], [0], [0], [1], [0, 0, 1, 1], [], []>} : vector<8x8xf32>, vector<8x8xf32>, vector<8x8xf32> -> vector<8x8xf32>
    %54 = vector.extract_strided_slice %34 {offsets = [0, 8], sizes = [8, 8], strides = [1, 1]} : vector<8x32xf32> to vector<8x8xf32>
    %55 = vector.extract_strided_slice %35 {offsets = [0, 8], sizes = [8, 8], strides = [1, 1]} : vector<8x32xf32> to vector<8x8xf32>
    %56 = vector.extract_strided_slice %36 {offsets = [0, 8], sizes = [8, 8], strides = [1, 1]} : vector<8x32xf32> to vector<8x8xf32>
    %57 = tpu.transpose %55, [1, 0] : vector<8x8xf32> -> vector<8x8xf32>
    %cst_23 = arith.constant dense<0.000000e+00> : vector<8x8xf32>
    %58 = tpu.matmul %54, %57, %cst_23 {dimension_numbers = #tpu.dot_dimension_numbers<[1], [0], [0], [1], [0, 0, 1, 1], [], []>} : vector<8x8xf32>, vector<8x8xf32>, vector<8x8xf32> -> vector<8x8xf32>
    %59 = arith.addf %58, %3 : vector<8x8xf32>
    %cst_24 = arith.constant dense<0xFF800000> : vector<8xf32>
    %60 = vector.multi_reduction <maximumf>, %59, %cst_24 [1] : vector<8x8xf32> to vector<8xf32>
    %61 = vector.shape_cast %60 : vector<8xf32> to vector<8x1xf32>
    %62 = vector.broadcast %61 : vector<8x1xf32> to vector<8x8xf32>
    %63 = arith.subf %59, %62 : vector<8x8xf32>
    %64 = math.exp %63 : vector<8x8xf32>
    %cst_25 = arith.constant dense<0.000000e+00> : vector<8xf32>
    %65 = vector.multi_reduction <add>, %64, %cst_25 [1] : vector<8x8xf32> to vector<8xf32>
    %66 = vector.shape_cast %65 : vector<8xf32> to vector<8x1xf32>
    %67 = tpu.reciprocal %66 {approx = true} : vector<8x1xf32> -> vector<8x1xf32>
    %68 = vector.broadcast %67 : vector<8x1xf32> to vector<8x8xf32>
    %69 = arith.mulf %64, %68 : vector<8x8xf32>
    %cst_26 = arith.constant dense<0.000000e+00> : vector<8x8xf32>
    %70 = tpu.matmul %69, %56, %cst_26 {dimension_numbers = #tpu.dot_dimension_numbers<[1], [0], [0], [1], [0, 0, 1, 1], [], []>} : vector<8x8xf32>, vector<8x8xf32>, vector<8x8xf32> -> vector<8x8xf32>
    %71 = vector.extract_strided_slice %34 {offsets = [0, 16], sizes = [8, 8], strides = [1, 1]} : vector<8x32xf32> to vector<8x8xf32>
    %72 = vector.extract_strided_slice %35 {offsets = [0, 16], sizes = [8, 8], strides = [1, 1]} : vector<8x32xf32> to vector<8x8xf32>
    %73 = vector.extract_strided_slice %36 {offsets = [0, 16], sizes = [8, 8], strides = [1, 1]} : vector<8x32xf32> to vector<8x8xf32>
    %74 = tpu.transpose %72, [1, 0] : vector<8x8xf32> -> vector<8x8xf32>
    %cst_27 = arith.constant dense<0.000000e+00> : vector<8x8xf32>
    %75 = tpu.matmul %71, %74, %cst_27 {dimension_numbers = #tpu.dot_dimension_numbers<[1], [0], [0], [1], [0, 0, 1, 1], [], []>} : vector<8x8xf32>, vector<8x8xf32>, vector<8x8xf32> -> vector<8x8xf32>
    %76 = arith.addf %75, %3 : vector<8x8xf32>
    %cst_28 = arith.constant dense<0xFF800000> : vector<8xf32>
    %77 = vector.multi_reduction <maximumf>, %76, %cst_28 [1] : vector<8x8xf32> to vector<8xf32>
    %78 = vector.shape_cast %77 : vector<8xf32> to vector<8x1xf32>
    %79 = vector.broadcast %78 : vector<8x1xf32> to vector<8x8xf32>
    %80 = arith.subf %76, %79 : vector<8x8xf32>
    %81 = math.exp %80 : vector<8x8xf32>
    %cst_29 = arith.constant dense<0.000000e+00> : vector<8xf32>
    %82 = vector.multi_reduction <add>, %81, %cst_29 [1] : vector<8x8xf32> to vector<8xf32>
    %83 = vector.shape_cast %82 : vector<8xf32> to vector<8x1xf32>
    %84 = tpu.reciprocal %83 {approx = true} : vector<8x1xf32> -> vector<8x1xf32>
    %85 = vector.broadcast %84 : vector<8x1xf32> to vector<8x8xf32>
    %86 = arith.mulf %81, %85 : vector<8x8xf32>
    %cst_30 = arith.constant dense<0.000000e+00> : vector<8x8xf32>
    %87 = tpu.matmul %86, %73, %cst_30 {dimension_numbers = #tpu.dot_dimension_numbers<[1], [0], [0], [1], [0, 0, 1, 1], [], []>} : vector<8x8xf32>, vector<8x8xf32>, vector<8x8xf32> -> vector<8x8xf32>
    %88 = vector.extract_strided_slice %34 {offsets = [0, 24], sizes = [8, 8], strides = [1, 1]} : vector<8x32xf32> to vector<8x8xf32>
    %89 = vector.extract_strided_slice %35 {offsets = [0, 24], sizes = [8, 8], strides = [1, 1]} : vector<8x32xf32> to vector<8x8xf32>
    %90 = vector.extract_strided_slice %36 {offsets = [0, 24], sizes = [8, 8], strides = [1, 1]} : vector<8x32xf32> to vector<8x8xf32>
    %91 = tpu.transpose %89, [1, 0] : vector<8x8xf32> -> vector<8x8xf32>
    %cst_31 = arith.constant dense<0.000000e+00> : vector<8x8xf32>
    %92 = tpu.matmul %88, %91, %cst_31 {dimension_numbers = #tpu.dot_dimension_numbers<[1], [0], [0], [1], [0, 0, 1, 1], [], []>} : vector<8x8xf32>, vector<8x8xf32>, vector<8x8xf32> -> vector<8x8xf32>
    %93 = arith.addf %92, %3 : vector<8x8xf32>
    %cst_32 = arith.constant dense<0xFF800000> : vector<8xf32>
    %94 = vector.multi_reduction <maximumf>, %93, %cst_32 [1] : vector<8x8xf32> to vector<8xf32>
    %95 = vector.shape_cast %94 : vector<8xf32> to vector<8x1xf32>
    %96 = vector.broadcast %95 : vector<8x1xf32> to vector<8x8xf32>
    %97 = arith.subf %93, %96 : vector<8x8xf32>
    %98 = math.exp %97 : vector<8x8xf32>
    %cst_33 = arith.constant dense<0.000000e+00> : vector<8xf32>
    %99 = vector.multi_reduction <add>, %98, %cst_33 [1] : vector<8x8xf32> to vector<8xf32>
    %100 = vector.shape_cast %99 : vector<8xf32> to vector<8x1xf32>
    %101 = tpu.reciprocal %100 {approx = true} : vector<8x1xf32> -> vector<8x1xf32>
    %102 = vector.broadcast %101 : vector<8x1xf32> to vector<8x8xf32>
    %103 = arith.mulf %98, %102 : vector<8x8xf32>
    %cst_34 = arith.constant dense<0.000000e+00> : vector<8x8xf32>
    %104 = tpu.matmul %103, %90, %cst_34 {dimension_numbers = #tpu.dot_dimension_numbers<[1], [0], [0], [1], [0, 0, 1, 1], [], []>} : vector<8x8xf32>, vector<8x8xf32>, vector<8x8xf32> -> vector<8x8xf32>
    %105 = tpu.concatenate %53, %70, %87, %104 in 1 : vector<8x8xf32>, vector<8x8xf32>, vector<8x8xf32>, vector<8x8xf32> -> vector<8x32xf32>
    %c0_35 = arith.constant 0 : index
    %c0_36 = arith.constant 0 : index
    %106 = vector.load %arg7[%c0_35, %c0_36] : memref<32x32xf32, #tpu.memory_space<vmem>>, vector<32x32xf32>
    %cst_37 = arith.constant dense<0.000000e+00> : vector<8x32xf32>
    %107 = tpu.matmul %105, %106, %cst_37 {dimension_numbers = #tpu.dot_dimension_numbers<[1], [0], [0], [1], [0, 0, 1, 1], [], []>} : vector<8x32xf32>, vector<32x32xf32>, vector<8x32xf32> -> vector<8x32xf32>
    %c0_38 = arith.constant 0 : index
    %c0_39 = arith.constant 0 : index
    %108 = vector.load %arg8[%c0_38, %c0_39] : memref<1x32xf32, #tpu.memory_space<vmem>>, vector<1x32xf32>
    %109 = vector.broadcast %108 : vector<1x32xf32> to vector<8x32xf32>
    %110 = arith.addf %107, %109 : vector<8x32xf32>
    %111 = arith.addf %1, %110 : vector<8x32xf32>
    %c0_40 = arith.constant 0 : index
    %c0_41 = arith.constant 0 : index
    %112 = vector.load %arg9[%c0_40, %c0_41] : memref<1x32xf32, #tpu.memory_space<vmem>>, vector<1x32xf32>
    %c0_42 = arith.constant 0 : index
    %c0_43 = arith.constant 0 : index
    %113 = vector.load %arg10[%c0_42, %c0_43] : memref<1x32xf32, #tpu.memory_space<vmem>>, vector<1x32xf32>
    %cst_44 = arith.constant dense<0.000000e+00> : vector<8xf32>
    %114 = vector.multi_reduction <add>, %111, %cst_44 [1] : vector<8x32xf32> to vector<8xf32>
    %115 = vector.shape_cast %114 : vector<8xf32> to vector<8x1xf32>
    %cst_45 = arith.constant 3.200000e+01 : f32
    %116 = vector.broadcast %cst_45 : f32 to vector<8x1xf32>
    %117 = arith.divf %115, %116 : vector<8x1xf32>
    %118 = vector.broadcast %117 : vector<8x1xf32> to vector<8x32xf32>
    %119 = arith.subf %111, %118 : vector<8x32xf32>
    %120 = arith.mulf %119, %119 : vector<8x32xf32>
    %cst_46 = arith.constant dense<0.000000e+00> : vector<8xf32>
    %121 = vector.multi_reduction <add>, %120, %cst_46 [1] : vector<8x32xf32> to vector<8xf32>
    %122 = vector.shape_cast %121 : vector<8xf32> to vector<8x1xf32>
    %cst_47 = arith.constant 0.0322580636 : f32
    %123 = vector.broadcast %cst_47 : f32 to vector<8x1xf32>
    %124 = arith.mulf %122, %123 : vector<8x1xf32>
    %125 = math.sqrt %124 : vector<8x1xf32>
    %126 = vector.broadcast %112 : vector<1x32xf32> to vector<8x32xf32>
    %127 = arith.mulf %126, %119 : vector<8x32xf32>
    %cst_48 = arith.constant 9.99999997E-7 : f32
    %128 = vector.broadcast %cst_48 : f32 to vector<8x1xf32>
    %129 = arith.addf %125, %128 : vector<8x1xf32>
    %130 = tpu.reciprocal %129 {approx = true} : vector<8x1xf32> -> vector<8x1xf32>
    %131 = vector.broadcast %130 : vector<8x1xf32> to vector<8x32xf32>
    %132 = arith.mulf %127, %131 : vector<8x32xf32>
    %133 = vector.broadcast %113 : vector<1x32xf32> to vector<8x32xf32>
    %134 = arith.addf %132, %133 : vector<8x32xf32>
    %c0_49 = arith.constant 0 : index
    %c0_50 = arith.constant 0 : index
    %135 = vector.load %arg11[%c0_49, %c0_50] : memref<32x64xf32, #tpu.memory_space<vmem>>, vector<32x64xf32>
    %cst_51 = arith.constant dense<0.000000e+00> : vector<8x64xf32>
    %136 = tpu.matmul %134, %135, %cst_51 {dimension_numbers = #tpu.dot_dimension_numbers<[1], [0], [0], [1], [0, 0, 1, 1], [], []>} : vector<8x32xf32>, vector<32x64xf32>, vector<8x64xf32> -> vector<8x64xf32>
    %c0_52 = arith.constant 0 : index
    %c0_53 = arith.constant 0 : index
    %137 = vector.load %arg12[%c0_52, %c0_53] : memref<1x64xf32, #tpu.memory_space<vmem>>, vector<1x64xf32>
    %138 = vector.broadcast %137 : vector<1x64xf32> to vector<8x64xf32>
    %139 = arith.addf %136, %138 : vector<8x64xf32>
    %cst_54 = arith.constant 0.000000e+00 : f32
    %140 = vector.broadcast %cst_54 : f32 to vector<8x64xf32>
    %141 = arith.maximumf %139, %140 : vector<8x64xf32>
    %c0_55 = arith.constant 0 : index
    %c0_56 = arith.constant 0 : index
    %142 = vector.load %arg13[%c0_55, %c0_56] : memref<64x32xf32, #tpu.memory_space<vmem>>, vector<64x32xf32>
    %cst_57 = arith.constant dense<0.000000e+00> : vector<8x32xf32>
    %143 = tpu.matmul %141, %142, %cst_57 {dimension_numbers = #tpu.dot_dimension_numbers<[1], [0], [0], [1], [0, 0, 1, 1], [], []>} : vector<8x64xf32>, vector<64x32xf32>, vector<8x32xf32> -> vector<8x32xf32>
    %c0_58 = arith.constant 0 : index
    %c0_59 = arith.constant 0 : index
    %144 = vector.load %arg14[%c0_58, %c0_59] : memref<1x32xf32, #tpu.memory_space<vmem>>, vector<1x32xf32>
    %145 = vector.broadcast %144 : vector<1x32xf32> to vector<8x32xf32>
    %146 = arith.addf %143, %145 : vector<8x32xf32>
    %147 = arith.addf %111, %146 : vector<8x32xf32>
    %c0_60 = arith.constant 0 : index
    %c0_61 = arith.constant 0 : index
    %c0_62 = arith.constant 0 : index
    %148 = vector.load %arg15[%c0_60, %c0_61, %c0_62] : memref<1x8x32xf32, #tpu.memory_space<vmem>>, vector<1x8x32xf32>
    %149 = vector.shape_cast %148 : vector<1x8x32xf32> to vector<8x32xf32>
    %150 = vector.shape_cast %147 : vector<8x32xf32> to vector<1x8x32xf32>
    tpu.vector_store %arg15[%c0_60, %c0_61, %c0_62], %150 {strides = array<i32>} : memref<1x8x32xf32, #tpu.memory_space<vmem>>, vector<1x8x32xf32>,
    return
  }
  func.func @transform_0(%arg0: i32) -> (i32, i32, i32) {
    %c0_i32 = arith.constant 0 : i32
    %c0_i32_0 = arith.constant 0 : i32
    %c0_i32_1 = arith.constant 0 : i32
    return %arg0, %c0_i32, %c0_i32_0 : i32, i32, i32
  }
  func.func @transform_1(%arg0: i32) -> (i32, i32, i32) {
    %c0_i32 = arith.constant 0 : i32
    %c0_i32_0 = arith.constant 0 : i32
    %c0_i32_1 = arith.constant 0 : i32
    return %arg0, %c0_i32, %c0_i32_0 : i32, i32, i32
  }
  func.func @transform_2(%arg0: i32) -> (i32, i32) {
    %c0_i32 = arith.constant 0 : i32
    %c0_i32_0 = arith.constant 0 : i32
    %c0_i32_1 = arith.constant 0 : i32
    return %c0_i32, %c0_i32_0 : i32, i32
  }
  func.func @transform_3(%arg0: i32) -> (i32, i32) {
    %c0_i32 = arith.constant 0 : i32
    %c0_i32_0 = arith.constant 0 : i32
    %c0_i32_1 = arith.constant 0 : i32
    return %c0_i32, %c0_i32_0 : i32, i32
  }
  func.func @transform_4(%arg0: i32) -> (i32, i32) {
    %c0_i32 = arith.constant 0 : i32
    %c0_i32_0 = arith.constant 0 : i32
    %c0_i32_1 = arith.constant 0 : i32
    return %c0_i32, %c0_i32_0 : i32, i32
  }
  func.func @transform_5(%arg0: i32) -> (i32, i32) {
    %c0_i32 = arith.constant 0 : i32
    %c0_i32_0 = arith.constant 0 : i32
    %c0_i32_1 = arith.constant 0 : i32
    return %c0_i32, %c0_i32_0 : i32, i32
  }
  func.func @transform_6(%arg0: i32) -> (i32, i32) {
    %c0_i32 = arith.constant 0 : i32
    %c0_i32_0 = arith.constant 0 : i32
    %c0_i32_1 = arith.constant 0 : i32
    return %c0_i32, %c0_i32_0 : i32, i32
  }
  func.func @transform_7(%arg0: i32) -> (i32, i32) {
    %c0_i32 = arith.constant 0 : i32
    %c0_i32_0 = arith.constant 0 : i32
    %c0_i32_1 = arith.constant 0 : i32
    return %c0_i32, %c0_i32_0 : i32, i32
  }
  func.func @transform_8(%arg0: i32) -> (i32, i32) {
    %c0_i32 = arith.constant 0 : i32
    %c0_i32_0 = arith.constant 0 : i32
    %c0_i32_1 = arith.constant 0 : i32
    return %c0_i32, %c0_i32_0 : i32, i32
  }
  func.func @transform_9(%arg0: i32) -> (i32, i32) {
    %c0_i32 = arith.constant 0 : i32
    %c0_i32_0 = arith.constant 0 : i32
    %c0_i32_1 = arith.constant 0 : i32
    return %c0_i32, %c0_i32_0 : i32, i32
  }
  func.func @transform_10(%arg0: i32) -> (i32, i32) {
    %c0_i32 = arith.constant 0 : i32
    %c0_i32_0 = arith.constant 0 : i32
    %c0_i32_1 = arith.constant 0 : i32
    return %c0_i32, %c0_i32_0 : i32, i32
  }
  func.func @transform_11(%arg0: i32) -> (i32, i32) {
    %c0_i32 = arith.constant 0 : i32
    %c0_i32_0 = arith.constant 0 : i32
    %c0_i32_1 = arith.constant 0 : i32
    return %c0_i32, %c0_i32_0 : i32, i32
  }
  func.func @transform_12(%arg0: i32) -> (i32, i32) {
    %c0_i32 = arith.constant 0 : i32
    %c0_i32_0 = arith.constant 0 : i32
    %c0_i32_1 = arith.constant 0 : i32
    return %c0_i32, %c0_i32_0 : i32, i32
  }
  func.func @transform_13(%arg0: i32) -> (i32, i32) {
    %c0_i32 = arith.constant 0 : i32
    %c0_i32_0 = arith.constant 0 : i32
    %c0_i32_1 = arith.constant 0 : i32
    return %c0_i32, %c0_i32_0 : i32, i32
  }
  func.func @transform_14(%arg0: i32) -> (i32, i32, i32) {
    %c0_i32 = arith.constant 0 : i32
    %c0_i32_0 = arith.constant 0 : i32
    %c0_i32_1 = arith.constant 0 : i32
    return %arg0, %c0_i32, %c0_i32_0 : i32, i32, i32
  }
}

</mosaic_0001>

<llo_original>
// kernel: encoder_layer_forward.1
$region0: #{encoder_layer_forward.1}
  #allocation0 [shape = 'u32[]', space=smem, size = 0x4, offset = 0x4, fixed_abs, tag = 'smem constant byte address 0x4 - core index']
  #allocation1 [shape = 'u32[72,128]{1,0:T(1,128)}', space=vmem, size = 0x9000, scoped, tag = 'internal scratch']
  %s0 = inlined_call_operand.vmem [shape: f32[2,8,32], index: 0, kind: input, shape index: {}]
  %s1 = inlined_call_operand.vmem [shape: f32[2,8,8], index: 1, kind: input, shape index: {}]
  %s2 = inlined_call_operand.vmem [shape: f32[1,32], index: 2, kind: input, shape index: {}]
  %s3 = inlined_call_operand.vmem [shape: f32[1,32], index: 3, kind: input, shape index: {}]
  %s4 = inlined_call_operand.vmem [shape: f32[32,96], index: 4, kind: input, shape index: {}]
  %s5 = inlined_call_operand.vmem [shape: f32[1,96], index: 5, kind: input, shape index: {}]
  %s6 = inlined_call_operand.vmem [shape: f32[32,32], index: 6, kind: input, shape index: {}]
  %s7 = inlined_call_operand.vmem [shape: f32[1,32], index: 7, kind: input, shape index: {}]
  %s8 = inlined_call_operand.vmem [shape: f32[1,32], index: 8, kind: input, shape index: {}]
  %s9 = inlined_call_operand.vmem [shape: f32[1,32], index: 9, kind: input, shape index: {}]
  %s10 = inlined_call_operand.vmem [shape: f32[32,64], index: 10, kind: input, shape index: {}]
  %s11 = inlined_call_operand.hbm [shape: f32[1,64], index: 11, kind: input, shape index: {}]
  %s12 = inlined_call_operand.vmem [shape: f32[64,32], index: 12, kind: input, shape index: {}]
  %s13 = inlined_call_operand.hbm [shape: f32[1,32], index: 13, kind: input, shape index: {}]
  %s14 = inlined_call_operand.hbm [shape: f32[2,8,32], index: 14, kind: output, shape index: {}]
  %s15 = sld [smem:[#allocation0]]
  $region97: #{encoder_layer_forward.1} parent=0
    _
  %s17 = ssub.s32 1, %s15
  %s18 = scalar_select 0, %s17, %s15
  $region1: #{encoder_layer_forward.1} parent=0
    #allocation2 [shape = 'u8[512]{0}', space=vmem, size = 0x400, scoped, tag = 'input window, operand 11, single buffered']
    #allocation3 [shape = 's32[2]{0}', space=sflag, size = 0x8, scoped, tag = 'scoped memory for encoder_layer_forward.1']
    #allocation4 [shape = 's32[2]{0}', space=sflag, size = 0x8, scoped, tag = 'scoped memory for encoder_layer_forward.1']
    #allocation5 [shape = 'u8[512]{0}', space=vmem, size = 0x400, scoped, tag = 'input window, operand 13, single buffered']
    #allocation6 [shape = 's32[1]{0}', space=sflag, size = 0x4, scoped, tag = 'scoped memory for encoder_layer_forward.1']
    #allocation7 [shape = 'u8[8192]{0}', space=vmem, size = 0x2000, scoped, tag = 'output window, operand 0']
    %19 = vsyncpa [#allocation3], 0
    %20 = vsyncpa [#allocation6], 0
    %21 = vsyncpa [#allocation4], 0
    %s22 = scalar_lea.sflag [#allocation4], 1
    %23 = vsyncpa %s22, 0
    loop: start=0, step=1, limit=4
    $region2: #{encoder_layer_forward.1} parent=1 // loop_pre_header
      _
    $region3: #{encoder_layer_forward.1} parent=1 // loop_header
      %s25 = sphi 0, %s29
      %p26 = scmp.ge.s32.totalorder %s25, 4
      %s35 = sphi 0, %s37
      %s38 = sphi 0, %s35
      %s39 = sphi 0, %s38
      %s55 = sphi 0, %s39
      %s61 = sphi 0, %s63
      %s64 = sphi 0, %s61
      %s65 = sphi 0, %s64
      %s81 = sphi 0, %s65
      %s85 = sphi 0, %s85
      %s87 = sphi 0, %s85
      %s88 = sphi 0, %s87
      %s102 = sphi 0, %s88
      %s106 = sphi 0, %s106
      %s108 = sphi 0, %s106
      %s109 = sphi 0, %s108
      %s123 = sphi 0, %s109
      %s127 = sphi 0, %s127
      %s129 = sphi 0, %s127
      %s130 = sphi 0, %s129
      %s144 = sphi 0, %s130
      %s148 = sphi 0, %s148
      %s150 = sphi 0, %s148
      %s151 = sphi 0, %s150
      %s165 = sphi 0, %s151
      %s169 = sphi 0, %s169
      %s171 = sphi 0, %s169
      %s172 = sphi 0, %s171
      %s186 = sphi 0, %s172
      %s190 = sphi 0, %s190
      %s192 = sphi 0, %s190
      %s193 = sphi 0, %s192
      %s207 = sphi 0, %s193
      %s211 = sphi 0, %s211
      %s213 = sphi 0, %s211
      %s214 = sphi 0, %s213
      %s228 = sphi 0, %s214
      %s232 = sphi 0, %s232
      %s234 = sphi 0, %s232
      %s235 = sphi 0, %s234
      %s249 = sphi 0, %s235
      %s253 = sphi 0, %s253
      %s255 = sphi 0, %s253
      %s256 = sphi 0, %s255
      %s270 = sphi 0, %s256
      %s274 = sphi 0, %s274
      %s276 = sphi 0, %s274
      %s277 = sphi 0, %s276
      %s291 = sphi 0, %s277
      %s295 = sphi 0, %s295
      %s297 = sphi 0, %s295
      %s298 = sphi 0, %s297
      %s312 = sphi 0, %s298
      %s316 = sphi 0, %s316
      %s318 = sphi 0, %s316
      %s319 = sphi 0, %s318
      %s333 = sphi 0, %s319
      %s339 = sphi 0, %s341
      %s342 = sphi 0, %s339
      %s343 = sphi 0, %s342
      %s359 = sphi 0, %s343
    $region4: #{encoder_layer_forward.1} parent=1 // loop_header_branch
      %28 = sbr.rel (%p26) target = $region8
    $region5: #{encoder_layer_forward.1} parent=1 // loop_body
      %s30 = ssub.s32 %s25, 1
      %s31 = ssub.s32 %s25, 2
      %s32 = sadd.s32 %s25, 1
      %s33 = ssub.s32 %s25, %s32
      %p34 = scmp.eq.s32.totalorder %s33, 0
      %s36 = sadd.s32 %s35, 1
      %s37 = scalar_select %p34, %s35, %s36
      %p40 = pneg %p34
      %p41 = scmp.eq.s32.totalorder %s25, 1
      %p42 = por %p40, %p41
      %p43 = scmp.ne.s32.totalorder %s35, %s38
      %p44 = scmp.eq.s32.totalorder %s25, 0
      %p45 = por %p43, %p44
      %p46 = scmp.ne.s32.totalorder %s35, %s38
      %p47 = scmp.eq.s32.totalorder %s30, 1
      %p48 = por %p46, %p47
      %p49 = scmp.ne.s32.totalorder %s38, %s39
      %p50 = scmp.eq.s32.totalorder %s30, 0
      %p51 = por %p49, %p50
      %p52 = scmp.ne.s32.totalorder %s38, %s39
      %p53 = scmp.eq.s32.totalorder %s31, 1
      %p54 = por %p52, %p53
      %p56 = scmp.ne.s32.totalorder %s39, %s55
      %p57 = scmp.eq.s32.totalorder %s31, 0
      %p58 = por %p56, %p57
      %s59 = ssub.s32 %s25, %s32
      %p60 = scmp.eq.s32.totalorder %s59, 0
      %s62 = sadd.s32 %s61, 1
      %s63 = scalar_select %p60, %s61, %s62
      %p66 = pneg %p60
      %p67 = scmp.eq.s32.totalorder %s25, 1
      %p68 = por %p66, %p67
      %p69 = scmp.ne.s32.totalorder %s61, %s64
      %p70 = scmp.eq.s32.totalorder %s25, 0
      %p71 = por %p69, %p70
      %p72 = scmp.ne.s32.totalorder %s61, %s64
      %p73 = scmp.eq.s32.totalorder %s30, 1
      %p74 = por %p72, %p73
      %p75 = scmp.ne.s32.totalorder %s64, %s65
      %p76 = scmp.eq.s32.totalorder %s30, 0
      %p77 = por %p75, %p76
      %p78 = scmp.ne.s32.totalorder %s64, %s65
      %p79 = scmp.eq.s32.totalorder %s31, 1
      %p80 = por %p78, %p79
      %p82 = scmp.ne.s32.totalorder %s65, %s81
      %p83 = scmp.eq.s32.totalorder %s31, 0
      %p84 = por %p82, %p83
      %s86 = sadd.s32 %s85, 1
      %p89 = scmp.eq.s32.totalorder %s25, 1
      %p90 = scmp.ne.s32.totalorder %s85, %s87
      %p91 = scmp.eq.s32.totalorder %s25, 0
      %p92 = por %p90, %p91
      %p93 = scmp.ne.s32.totalorder %s85, %s87
      %p94 = scmp.eq.s32.totalorder %s30, 1
      %p95 = por %p93, %p94
      %p96 = scmp.ne.s32.totalorder %s87, %s88
      %p97 = scmp.eq.s32.totalorder %s30, 0
      %p98 = por %p96, %p97
      %p99 = scmp.ne.s32.totalorder %s87, %s88
      %p100 = scmp.eq.s32.totalorder %s31, 1
      %p101 = por %p99, %p100
      %p103 = scmp.ne.s32.totalorder %s88, %s102
      %p104 = scmp.eq.s32.totalorder %s31, 0
      %p105 = por %p103, %p104
      %s107 = sadd.s32 %s106, 1
      %p110 = scmp.eq.s32.totalorder %s25, 1
      %p111 = scmp.ne.s32.totalorder %s106, %s108
      %p112 = scmp.eq.s32.totalorder %s25, 0
      %p113 = por %p111, %p112
      %p114 = scmp.ne.s32.totalorder %s106, %s108
      %p115 = scmp.eq.s32.totalorder %s30, 1
      %p116 = por %p114, %p115
      %p117 = scmp.ne.s32.totalorder %s108, %s109
      %p118 = scmp.eq.s32.totalorder %s30, 0
      %p119 = por %p117, %p118
      %p120 = scmp.ne.s32.totalorder %s108, %s109
      %p121 = scmp.eq.s32.totalorder %s31, 1
      %p122 = por %p120, %p121
      %p124 = scmp.ne.s32.totalorder %s109, %s123
      %p125 = scmp.eq.s32.totalorder %s31, 0
      %p126 = por %p124, %p125
      %s128 = sadd.s32 %s127, 1
      %p131 = scmp.eq.s32.totalorder %s25, 1
      %p132 = scmp.ne.s32.totalorder %s127, %s129
      %p133 = scmp.eq.s32.totalorder %s25, 0
      %p134 = por %p132, %p133
      %p135 = scmp.ne.s32.totalorder %s127, %s129
      %p136 = scmp.eq.s32.totalorder %s30, 1
      %p137 = por %p135, %p136
      %p138 = scmp.ne.s32.totalorder %s129, %s130
      %p139 = scmp.eq.s32.totalorder %s30, 0
      %p140 = por %p138, %p139
      %p141 = scmp.ne.s32.totalorder %s129, %s130
      %p142 = scmp.eq.s32.totalorder %s31, 1
      %p143 = por %p141, %p142
      %p145 = scmp.ne.s32.totalorder %s130, %s144
      %p146 = scmp.eq.s32.totalorder %s31, 0
      %p147 = por %p145, %p146
      %s149 = sadd.s32 %s148, 1
      %p152 = scmp.eq.s32.totalorder %s25, 1
      %p153 = scmp.ne.s32.totalorder %s148, %s150
      %p154 = scmp.eq.s32.totalorder %s25, 0
      %p155 = por %p153, %p154
      %p156 = scmp.ne.s32.totalorder %s148, %s150
      %p157 = scmp.eq.s32.totalorder %s30, 1
      %p158 = por %p156, %p157
      %p159 = scmp.ne.s32.totalorder %s150, %s151
      %p160 = scmp.eq.s32.totalorder %s30, 0
      %p161 = por %p159, %p160
      %p162 = scmp.ne.s32.totalorder %s150, %s151
      %p163 = scmp.eq.s32.totalorder %s31, 1
      %p164 = por %p162, %p163
      %p166 = scmp.ne.s32.totalorder %s151, %s165
      %p167 = scmp.eq.s32.totalorder %s31, 0
      %p168 = por %p166, %p167
      %s170 = sadd.s32 %s169, 1
      %p173 = scmp.eq.s32.totalorder %s25, 1
      %p174 = scmp.ne.s32.totalorder %s169, %s171
      %p175 = scmp.eq.s32.totalorder %s25, 0
      %p176 = por %p174, %p175
      %p177 = scmp.ne.s32.totalorder %s169, %s171
      %p178 = scmp.eq.s32.totalorder %s30, 1
      %p179 = por %p177, %p178
      %p180 = scmp.ne.s32.totalorder %s171, %s172
      %p181 = scmp.eq.s32.totalorder %s30, 0
      %p182 = por %p180, %p181
      %p183 = scmp.ne.s32.totalorder %s171, %s172
      %p184 = scmp.eq.s32.totalorder %s31, 1
      %p185 = por %p183, %p184
      %p187 = scmp.ne.s32.totalorder %s172, %s186
      %p188 = scmp.eq.s32.totalorder %s31, 0
      %p189 = por %p187, %p188
      %s191 = sadd.s32 %s190, 1
      %p194 = scmp.eq.s32.totalorder %s25, 1
      %p195 = scmp.ne.s32.totalorder %s190, %s192
      %p196 = scmp.eq.s32.totalorder %s25, 0
      %p197 = por %p195, %p196
      %p198 = scmp.ne.s32.totalorder %s190, %s192
      %p199 = scmp.eq.s32.totalorder %s30, 1
      %p200 = por %p198, %p199
      %p201 = scmp.ne.s32.totalorder %s192, %s193
      %p202 = scmp.eq.s32.totalorder %s30, 0
      %p203 = por %p201, %p202
      %p204 = scmp.ne.s32.totalorder %s192, %s193
      %p205 = scmp.eq.s32.totalorder %s31, 1
      %p206 = por %p204, %p205
      %p208 = scmp.ne.s32.totalorder %s193, %s207
      %p209 = scmp.eq.s32.totalorder %s31, 0
      %p210 = por %p208, %p209
      %s212 = sadd.s32 %s211, 1
      %p215 = scmp.eq.s32.totalorder %s25, 1
      %p216 = scmp.ne.s32.totalorder %s211, %s213
      %p217 = scmp.eq.s32.totalorder %s25, 0
      %p218 = por %p216, %p217
      %p219 = scmp.ne.s32.totalorder %s211, %s213
      %p220 = scmp.eq.s32.totalorder %s30, 1
      %p221 = por %p219, %p220
      %p222 = scmp.ne.s32.totalorder %s213, %s214
      %p223 = scmp.eq.s32.totalorder %s30, 0
      %p224 = por %p222, %p223
      %p225 = scmp.ne.s32.totalorder %s213, %s214
      %p226 = scmp.eq.s32.totalorder %s31, 1
      %p227 = por %p225, %p226
      %p229 = scmp.ne.s32.totalorder %s214, %s228
      %p230 = scmp.eq.s32.totalorder %s31, 0
      %p231 = por %p229, %p230
      %s233 = sadd.s32 %s232, 1
      %p236 = scmp.eq.s32.totalorder %s25, 1
      %p237 = scmp.ne.s32.totalorder %s232, %s234
      %p238 = scmp.eq.s32.totalorder %s25, 0
      %p239 = por %p237, %p238
      %p240 = scmp.ne.s32.totalorder %s232, %s234
      %p241 = scmp.eq.s32.totalorder %s30, 1
      %p242 = por %p240, %p241
      %p243 = scmp.ne.s32.totalorder %s234, %s235
      %p244 = scmp.eq.s32.totalorder %s30, 0
      %p245 = por %p243, %p244
      %p246 = scmp.ne.s32.totalorder %s234, %s235
      %p247 = scmp.eq.s32.totalorder %s31, 1
      %p248 = por %p246, %p247
      %p250 = scmp.ne.s32.totalorder %s235, %s249
      %p251 = scmp.eq.s32.totalorder %s31, 0
      %p252 = por %p250, %p251
      %s254 = sadd.s32 %s253, 1
      %p257 = scmp.eq.s32.totalorder %s25, 1
      %p258 = scmp.ne.s32.totalorder %s253, %s255
      %p259 = scmp.eq.s32.totalorder %s25, 0
      %p260 = por %p258, %p259
      %p261 = scmp.ne.s32.totalorder %s253, %s255
      %p262 = scmp.eq.s32.totalorder %s30, 1
      %p263 = por %p261, %p262
      %p264 = scmp.ne.s32.totalorder %s255, %s256
      %p265 = scmp.eq.s32.totalorder %s30, 0
      %p266 = por %p264, %p265
      %p267 = scmp.ne.s32.totalorder %s255, %s256
      %p268 = scmp.eq.s32.totalorder %s31, 1
      %p269 = por %p267, %p268
      %p271 = scmp.ne.s32.totalorder %s256, %s270
      %p272 = scmp.eq.s32.totalorder %s31, 0
      %p273 = por %p271, %p272
      %s275 = sadd.s32 %s274, 1
      %p278 = scmp.eq.s32.totalorder %s25, 1
      %p279 = scmp.ne.s32.totalorder %s274, %s276
      %p280 = scmp.eq.s32.totalorder %s25, 0
      %p281 = por %p279, %p280
      %p282 = scmp.ne.s32.totalorder %s274, %s276
      %p283 = scmp.eq.s32.totalorder %s30, 1
      %p284 = por %p282, %p283
      %p285 = scmp.ne.s32.totalorder %s276, %s277
      %p286 = scmp.eq.s32.totalorder %s30, 0
      %p287 = por %p285, %p286
      %p288 = scmp.ne.s32.totalorder %s276, %s277
      %p289 = scmp.eq.s32.totalorder %s31, 1
      %p290 = por %p288, %p289
      %p292 = scmp.ne.s32.totalorder %s277, %s291
      %p293 = scmp.eq.s32.totalorder %s31, 0
      %p294 = por %p292, %p293
      %s296 = sadd.s32 %s295, 1
      %p299 = scmp.eq.s32.totalorder %s25, 1
      %p300 = scmp.ne.s32.totalorder %s295, %s297
      %p301 = scmp.eq.s32.totalorder %s25, 0
      %p302 = por %p300, %p301
      %p303 = scmp.ne.s32.totalorder %s295, %s297
      %p304 = scmp.eq.s32.totalorder %s30, 1
      %p305 = por %p303, %p304
      %p306 = scmp.ne.s32.totalorder %s297, %s298
      %p307 = scmp.eq.s32.totalorder %s30, 0
      %p308 = por %p306, %p307
      %p309 = scmp.ne.s32.totalorder %s297, %s298
      %p310 = scmp.eq.s32.totalorder %s31, 1
      %p311 = por %p309, %p310
      %p313 = scmp.ne.s32.totalorder %s298, %s312
      %p314 = scmp.eq.s32.totalorder %s31, 0
      %p315 = por %p313, %p314
      %s317 = sadd.s32 %s316, 1
      %p320 = scmp.eq.s32.totalorder %s25, 1
      %p321 = scmp.ne.s32.totalorder %s316, %s318
      %p322 = scmp.eq.s32.totalorder %s25, 0
      %p323 = por %p321, %p322
      %p324 = scmp.ne.s32.totalorder %s316, %s318
      %p325 = scmp.eq.s32.totalorder %s30, 1
      %p326 = por %p324, %p325
      %p327 = scmp.ne.s32.totalorder %s318, %s319
      %p328 = scmp.eq.s32.totalorder %s30, 0
      %p329 = por %p327, %p328
      %p330 = scmp.ne.s32.totalorder %s318, %s319
      %p331 = scmp.eq.s32.totalorder %s31, 1
      %p332 = por %p330, %p331
      %p334 = scmp.ne.s32.totalorder %s319, %s333
      %p335 = scmp.eq.s32.totalorder %s31, 0
      %p336 = por %p334, %p335
      %s337 = ssub.s32 %s25, %s32
      %p338 = scmp.eq.s32.totalorder %s337, 0
      %s340 = sadd.s32 %s339, 1
      %s341 = scalar_select %p338, %s339, %s340
      %p344 = pneg %p338
      %p345 = scmp.eq.s32.totalorder %s25, 1
      %p346 = por %p344, %p345
      %p347 = scmp.ne.s32.totalorder %s339, %s342
      %p348 = scmp.eq.s32.totalorder %s25, 0
      %p349 = por %p347, %p348
      %p350 = scmp.ne.s32.totalorder %s339, %s342
      %p351 = scmp.eq.s32.totalorder %s30, 1
      %p352 = por %p350, %p351
      %p353 = scmp.ne.s32.totalorder %s342, %s343
      %p354 = scmp.eq.s32.totalorder %s30, 0
      %p355 = por %p353, %p354
      %p356 = scmp.ne.s32.totalorder %s342, %s343
      %p357 = scmp.eq.s32.totalorder %s31, 1
      %p358 = por %p356, %p357
      %p360 = scmp.ne.s32.totalorder %s343, %s359
      %p361 = scmp.eq.s32.totalorder %s31, 0
      %p362 = por %p360, %p361
      %p363 = scmp.le.s32.totalorder 1, %s25
      %p364 = scmp.lt.s32.totalorder %s25, 3
      %p365 = pnand %p363, %p364
      %p366 = pneg %p365
      // Predicated region
      $region9: #{encoder_layer_forward.1} parent=5 // pred_check
        _
      $region10: #{encoder_layer_forward.1} parent=5 // pred_check_branch
        %368 = sbr.rel (%p365) target = $region12
      $region11: #{encoder_layer_forward.1} parent=5 // pred_region
        %s369 = ssub.s32 %s25, 1
        // Predicated region
        $region13: #{encoder_layer_forward.1} parent=11 // pred_check
          %p370 = pneg %p98
        $region14: #{encoder_layer_forward.1} parent=11 // pred_check_branch
          %372 = sbr.rel (%p370) target = $region16
        $region15: #{encoder_layer_forward.1} parent=11 // pred_region
          _
        $region16: #{encoder_layer_forward.1} parent=11 // pred_fallthru
          _
        // Predicated region
        $region17: #{encoder_layer_forward.1} parent=11 // pred_check
          %p373 = pneg %p119
        $region18: #{encoder_layer_forward.1} parent=11 // pred_check_branch
          %375 = sbr.rel (%p373) target = $region20
        $region19: #{encoder_layer_forward.1} parent=11 // pred_region
          _
        $region20: #{encoder_layer_forward.1} parent=11 // pred_fallthru
          _
        // Predicated region
        $region21: #{encoder_layer_forward.1} parent=11 // pred_check
          %p376 = pneg %p140
        $region22: #{encoder_layer_forward.1} parent=11 // pred_check_branch
          %378 = sbr.rel (%p376) target = $region24
        $region23: #{encoder_layer_forward.1} parent=11 // pred_region
          _
        $region24: #{encoder_layer_forward.1} parent=11 // pred_fallthru
          _
        // Predicated region
        $region25: #{encoder_layer_forward.1} parent=11 // pred_check
          %p379 = pneg %p161
        $region26: #{encoder_layer_forward.1} parent=11 // pred_check_branch
          %381 = sbr.rel (%p379) target = $region28
        $region27: #{encoder_layer_forward.1} parent=11 // pred_region
          _
        $region28: #{encoder_layer_forward.1} parent=11 // pred_fallthru
          _
        // Predicated region
        $region29: #{encoder_layer_forward.1} parent=11 // pred_check
          %p382 = pneg %p182
        $region30: #{encoder_layer_forward.1} parent=11 // pred_check_branch
          %384 = sbr.rel (%p382) target = $region32
        $region31: #{encoder_layer_forward.1} parent=11 // pred_region
          _
        $region32: #{encoder_layer_forward.1} parent=11 // pred_fallthru
          _
        // Predicated region
        $region33: #{encoder_layer_forward.1} parent=11 // pred_check
          %p385 = pneg %p203
        $region34: #{encoder_layer_forward.1} parent=11 // pred_check_branch
          %387 = sbr.rel (%p385) target = $region36
        $region35: #{encoder_layer_forward.1} parent=11 // pred_region
          _
        $region36: #{encoder_layer_forward.1} parent=11 // pred_fallthru
          _
        // Predicated region
        $region37: #{encoder_layer_forward.1} parent=11 // pred_check
          %p388 = pneg %p224
        $region38: #{encoder_layer_forward.1} parent=11 // pred_check_branch
          %390 = sbr.rel (%p388) target = $region40
        $region39: #{encoder_layer_forward.1} parent=11 // pred_region
          _
        $region40: #{encoder_layer_forward.1} parent=11 // pred_fallthru
          _
        // Predicated region
        $region41: #{encoder_layer_forward.1} parent=11 // pred_check
          %p391 = pneg %p245
        $region42: #{encoder_layer_forward.1} parent=11 // pred_check_branch
          %393 = sbr.rel (%p391) target = $region44
        $region43: #{encoder_layer_forward.1} parent=11 // pred_region
          _
        $region44: #{encoder_layer_forward.1} parent=11 // pred_fallthru
          _
        // Predicated region
        $region45: #{encoder_layer_forward.1} parent=11 // pred_check
          %p394 = pneg %p266
        $region46: #{encoder_layer_forward.1} parent=11 // pred_check_branch
          %396 = sbr.rel (%p394) target = $region48
        $region47: #{encoder_layer_forward.1} parent=11 // pred_region
          _
        $region48: #{encoder_layer_forward.1} parent=11 // pred_fallthru
          _
        // Predicated region
        $region49: #{encoder_layer_forward.1} parent=11 // pred_check
          %p397 = pneg %p287
        $region50: #{encoder_layer_forward.1} parent=11 // pred_check_branch
          %399 = sbr.rel (%p397) target = $region52
        $region51: #{encoder_layer_forward.1} parent=11 // pred_region
          %401 = vsyncadd [#allocation3], 0
          %s403 = sshll.u32 %s11, 4
          %s404 = int_to_ptr.hbm [resolvable:$true] %s403
          %s405 = sshll.u32 [#allocation2], 4
          %s406 = int_to_ptr.vmem [resolvable:$true] %s405
          %408 = dma.hbm_to_vmem [thread:$0]  %s404, 16, %s406, [#allocation3]
        $region52: #{encoder_layer_forward.1} parent=11 // pred_fallthru
          _
        // Predicated region
        $region53: #{encoder_layer_forward.1} parent=11 // pred_check
          %p409 = pneg %p308
        $region54: #{encoder_layer_forward.1} parent=11 // pred_check_branch
          %411 = sbr.rel (%p409) target = $region56
        $region55: #{encoder_layer_forward.1} parent=11 // pred_region
          _
        $region56: #{encoder_layer_forward.1} parent=11 // pred_fallthru
          _
        // Predicated region
        $region57: #{encoder_layer_forward.1} parent=11 // pred_check
          %p412 = pneg %p329
        $region58: #{encoder_layer_forward.1} parent=11 // pred_check_branch
          %414 = sbr.rel (%p412) target = $region60
        $region59: #{encoder_layer_forward.1} parent=11 // pred_region
          %416 = vsyncadd [#allocation6], 0
          %s418 = sshll.u32 %s13, 4
          %s419 = int_to_ptr.hbm [resolvable:$true] %s418
          %s420 = sshll.u32 [#allocation5], 4
          %s421 = int_to_ptr.vmem [resolvable:$true] %s420
          %423 = dma.hbm_to_vmem [thread:$0]  %s419, 16, %s421, [#allocation6]
        $region60: #{encoder_layer_forward.1} parent=11 // pred_fallthru
          _
      $region12: #{encoder_layer_forward.1} parent=5 // pred_fallthru
        _
      %p424 = scmp.lt.s32.totalorder %s25, 2
      // Predicated region
      $region61: #{encoder_layer_forward.1} parent=5 // pred_check
        %p425 = pneg %p424
      $region62: #{encoder_layer_forward.1} parent=5 // pred_check_branch
        %427 = sbr.rel (%p425) target = $region64
      $region63: #{encoder_layer_forward.1} parent=5 // pred_region
        // Predicated region
        $region65: #{encoder_layer_forward.1} parent=63 // pred_check
          %p428 = pneg %p45
        $region66: #{encoder_layer_forward.1} parent=63 // pred_check_branch
          %430 = sbr.rel (%p428) target = $region68
        $region67: #{encoder_layer_forward.1} parent=63 // pred_region
          %p431 = scmp.lt.s32.totalorder %s25, 1
          %s432 = scalar_select %p431, %s25, 1
          %s433 = smul.addr %s432, 8
          %s434 = scalar_lea.vmem %s0, %s433
        $region68: #{encoder_layer_forward.1} parent=63 // pred_fallthru
          _
        // Predicated region
        $region69: #{encoder_layer_forward.1} parent=63 // pred_check
          %p435 = pneg %p71
        $region70: #{encoder_layer_forward.1} parent=63 // pred_check_branch
          %437 = sbr.rel (%p435) target = $region72
        $region71: #{encoder_layer_forward.1} parent=63 // pred_region
          %p438 = scmp.lt.s32.totalorder %s25, 1
          %s439 = scalar_select %p438, %s25, 1
          %s440 = smul.addr %s439, 8
          %s441 = scalar_lea.vmem %s1, %s440
        $region72: #{encoder_layer_forward.1} parent=63 // pred_fallthru
          _
      $region64: #{encoder_layer_forward.1} parent=5 // pred_fallthru
        _
      %p442 = scmp.le.s32.totalorder 1, %s25
      %p443 = scmp.lt.s32.totalorder %s25, 3
      %p444 = pnand %p442, %p443
      %p445 = pneg %p444
      // Predicated region
      $region73: #{encoder_layer_forward.1} parent=5 // pred_check
        _
      $region74: #{encoder_layer_forward.1} parent=5 // pred_check_branch
        %447 = sbr.rel (%p444) target = $region76
      $region75: #{encoder_layer_forward.1} parent=5 // pred_region
        %s448 = ssub.s32 %s25, 1
        // Predicated region
        $region77: #{encoder_layer_forward.1} parent=75 // pred_check
          %p449 = pneg %p287
        $region78: #{encoder_layer_forward.1} parent=75 // pred_check_branch
          %451 = sbr.rel (%p449) target = $region80
        $region79: #{encoder_layer_forward.1} parent=75 // pred_region
          %453 = dma.done [#allocation3], 16
        $region80: #{encoder_layer_forward.1} parent=75 // pred_fallthru
          _
        // Predicated region
        $region81: #{encoder_layer_forward.1} parent=75 // pred_check
          %p454 = pneg %p329
        $region82: #{encoder_layer_forward.1} parent=75 // pred_check_branch
          %456 = sbr.rel (%p454) target = $region84
        $region83: #{encoder_layer_forward.1} parent=75 // pred_region
          %458 = dma.done [#allocation6], 16
        $region84: #{encoder_layer_forward.1} parent=75 // pred_fallthru
          _
        %p459 = scmp.lt.s32.totalorder %s30, 1
        %s460 = scalar_select %p459, %s30, 1
        %s461 = smul.addr %s460, 8
        %s462 = scalar_lea.vmem %s0, %s461
        %p463 = pneg %p51
        %p464 = pneg %p48
        %p465 = scmp.lt.s32.totalorder %s30, 1
        %s466 = scalar_select %p465, %s30, 1
        %s467 = smul.addr %s466, 8
        %s468 = scalar_lea.vmem %s1, %s467
        %p469 = pneg %p77
        %p470 = pneg %p74
        %p471 = pneg %p98
        %p472 = pneg %p95
        %p473 = pneg %p119
        %p474 = pneg %p116
        %p475 = pneg %p140
        %p476 = pneg %p137
        %p477 = pneg %p161
        %p478 = pneg %p158
        %p479 = pneg %p182
        %p480 = pneg %p179
        %p481 = pneg %p203
        %p482 = pneg %p200
        %p483 = pneg %p224
        %p484 = pneg %p221
        %p485 = pneg %p245
        %p486 = pneg %p242
        %p487 = pneg %p266
        %p488 = pneg %p263
        %p489 = pneg %p287
        %p490 = pneg %p284
        %p491 = pneg %p308
        %p492 = pneg %p305
        %p493 = pneg %p329
        %p494 = pneg %p326
        %p495 = pneg %p355
        %p496 = pneg %p352
        %s497 = sand.u32 %s342, 1
        %s498 = scalar_lea.sflag [#allocation4], %s497
        %s499 = sand.u32 %s342, 1
        %s500 = smul.addr %s499, 8
        %s501 = scalar_lea.vmem [#allocation7], %s500
        %p502 = scmp.lt.s32.totalorder %s30, 1
        %s503 = scalar_select %p502, %s30, 1
        %s504 = smul.addr %s503, 8
        %s505 = scalar_lea.vmem %s0, %s504
        %p506 = scmp.lt.s32.totalorder %s30, 1
        %s507 = scalar_select %p506, %s30, 1
        %s508 = smul.addr %s507, 8
        %s509 = scalar_lea.vmem %s1, %s508
        %v510 = vld [vmem:[%s505] sm:$0xff]
        %v511 = vld [vmem:[%s509] sm:$0xff]
        %v512 = vld [vmem:[%s2] sm:$0x1]
        %v513 = vld [vmem:[%s3] sm:$0x1]
        %vm514 = vcmask 261120
        %v515 = vsel %vm514, %v510, 0.0
        %516 = vadd.xlane.f32.xlu0 %v515
        %v517 = vpop.xlane.xlu0 %516
        %v518 = vrcp.pop 32.0
        %v519 = vmul.f32 32.0, %v518
        %v520 = vsub.f32 1.0, %v519
        %v521 = vmul.f32 %v518, %v520
        %v522 = vadd.f32 %v518, %v521
        %vm523 = vweird.f32 %v518
        %v524 = vsel %vm523, %v518, %v522
        %v525 = vmul.f32 %v517, %v524
        %v526 = vsub.f32 %v510, %v525
        %v527 = vmul.f32 %v526, %v526
        %v528 = vsel %vm514, %v527, 0.0
        %529 = vadd.xlane.f32.xlu0 %v528
        %v530 = vpop.xlane.xlu0 %529
        %v531 = vmul.f32 %v530, 0.032258064
        %v532 = vrsqrt.pop %v531
        %v533 = vmul.f32 %v532, %v531
        %v534 = vmul.f32 %v533, %v532
        %v535 = vmul.f32 0.5, %v534
        %v536 = vsub.f32 1.5, %v535
        %v537 = vmul.f32 %v532, %v536
        %v538 = vmul.f32 %v531, %v537
        %vm539 = vcmp.eq.f32.partialorder %v531, inf
        %v540 = vsel %vm539, %v531, %v538
        %vm541 = vcmp.eq.f32.partialorder %v531, 0.0
        %v542 = vand.u32 %v531, 2147483648
        %v543 = vsel %vm541, %v542, %v540
        %v545 = vperm.slane %v512, 0
        %v547 = vmul.f32 %v545, %v526
        %v548 = vadd.f32 %v543, 1e-06
        %v549 = vrcp.pop %v548
        %v550 = vmul.f32 %v547, %v549
        %v552 = vperm.slane %v513, 0
        %v554 = vadd.f32 %v550, %v552
        %v555 = vld [vmem:[%s4] sm:$0xff]
        %v556 = vld [vmem:[%s4 + $0x8] sm:$0xff]
        %v557 = vld [vmem:[%s4 + $0x10] sm:$0xff]
        %v558 = vld [vmem:[%s4 + $0x18] sm:$0xff]
        %v559 = vld [vmem:[%s5] sm:$0x1]
        %v561 = vperm.slane %v559, 0
        %v564 = vsel %vm514, %v554, 0
        %566 = vmatpush.msra.mxu0 0.0
        %567 = vmatpush.msra.mxu0 0.0
        %568 = vmatpush.msra.mxu0 0.0
        %569 = vmatpush.msra.mxu0 0.0
        %570 = vmatpush.msra.mxu0 0.0
        %571 = vmatpush.msra.mxu0 0.0
        %572 = vmatpush.msra.mxu0 0.0
        %573 = vmatpush.msra.mxu0 0.0
        %574 = vmatpush.msra.mxu0 0.0
        %575 = vmatpush.msra.mxu0 0.0
        %576 = vmatpush.msra.mxu0 0.0
        %577 = vmatpush.msra.mxu0 0.0
        %578 = vmatpush.msra.mxu0 %v558
        %579 = vmatpush.msra.mxu0 %v557
        %580 = vmatpush.msra.mxu0 %v556
        %581 = vmatpush.msra.mxu0 %v555
        %582 = vmatmul.f32.gmra.mxu0 %v564
        %v583 = vpop.f32.mrf.mxu0
        %v584 = vadd.f32 %v561, %v583
        %585 = vdwg.mxu0
        %v586 = vmul.f32 %v584, 0.35355338
        %588 = vrot.lane.b32.xlu0 %v584, 96
        %v589 = vpop.permute.xlu0 %588
        %vm590 = vcmask 64512
        %v592 = vsel %vm590, %v586, 0
        %v594 = vsel %vm590, %v589, 0
        %596 = vmatpush.xpose.msra.mxu0 0.0
        %597 = vmatpush.xpose.msra.mxu0 0.0
        %598 = vmatpush.xpose.msra.mxu0 0.0
        %599 = vmatpush.xpose.msra.mxu0 0.0
        %600 = vmatpush.xpose.msra.mxu0 0.0
        %601 = vmatpush.xpose.msra.mxu0 0.0
        %602 = vmatpush.xpose.msra.mxu0 0.0
        %603 = vmatpush.xpose.msra.mxu0 0.0
        %604 = vmatpush.xpose.msra.mxu0 0.0
        %605 = vmatpush.xpose.msra.mxu0 0.0
        %606 = vmatpush.xpose.msra.mxu0 0.0
        %607 = vmatpush.xpose.msra.mxu0 0.0
        %608 = vmatpush.xpose.msra.mxu0 0.0
        %609 = vmatpush.xpose.msra.mxu0 0.0
        %610 = vmatpush.xpose.msra.mxu0 0.0
        %611 = vmatpush.xpose.msra.mxu0 %v594
        %612 = vmatmul.f32.gmra.mxu0 %v592
        %v613 = vpop.f32.mrf.mxu0
        %v614 = vadd.f32 %v511, %v613
        %615 = vdwg.mxu0
        %v616 = vsel %vm590, %v614, -inf
        %617 = vmax.xlane.f32.xlu0 %v616
        %v618 = vpop.xlane.xlu0 %617
        %v619 = vsub.f32 %v614, %v618
        %v620 = vmul.f32 %v619, 1.442695
        %v621 = vpow.pop %v620
        %v622 = vsel %vm590, %v621, 0.0
        %623 = vadd.xlane.f32.xlu0 %v622
        %v624 = vpop.xlane.xlu0 %623
        %v625 = vrcp.pop %v624
        %v626 = vmul.f32 %v621, %v625
        %627 = vrot.lane.b32.xlu0 %v584, 64
        %v628 = vpop.permute.xlu0 %627
        %v631 = vsel %vm590, %v626, 0
        %633 = vmatpush.msra.mxu0 0.0
        %634 = vmatpush.msra.mxu0 0.0
        %635 = vmatpush.msra.mxu0 0.0
        %636 = vmatpush.msra.mxu0 0.0
        %637 = vmatpush.msra.mxu0 0.0
        %638 = vmatpush.msra.mxu0 0.0
        %639 = vmatpush.msra.mxu0 0.0
        %640 = vmatpush.msra.mxu0 0.0
        %641 = vmatpush.msra.mxu0 0.0
        %642 = vmatpush.msra.mxu0 0.0
        %643 = vmatpush.msra.mxu0 0.0
        %644 = vmatpush.msra.mxu0 0.0
        %645 = vmatpush.msra.mxu0 0.0
        %646 = vmatpush.msra.mxu0 0.0
        %647 = vmatpush.msra.mxu0 0.0
        %648 = vmatpush.msra.mxu0 %v628
        %649 = vmatmul.f32.gmra.mxu0 %v631
        %v650 = vpop.f32.mrf.mxu0
        %v651 = vadd.f32 0.0, %v650
        %652 = vdwg.mxu0
        %653 = vrot.lane.b32.xlu0 %v586, 120
        %v654 = vpop.permute.xlu0 %653
        %655 = vrot.lane.b32.xlu0 %v584, 88
        %v656 = vpop.permute.xlu0 %655
        %v657 = vsel %vm590, %v654, 0
        %v659 = vsel %vm590, %v656, 0
        %661 = vmatpush.xpose.msra.mxu0 0.0
        %662 = vmatpush.xpose.msra.mxu0 0.0
        %663 = vmatpush.xpose.msra.mxu0 0.0
        %664 = vmatpush.xpose.msra.mxu0 0.0
        %665 = vmatpush.xpose.msra.mxu0 0.0
        %666 = vmatpush.xpose.msra.mxu0 0.0
        %667 = vmatpush.xpose.msra.mxu0 0.0
        %668 = vmatpush.xpose.msra.mxu0 0.0
        %669 = vmatpush.xpose.msra.mxu0 0.0
        %670 = vmatpush.xpose.msra.mxu0 0.0
        %671 = vmatpush.xpose.msra.mxu0 0.0
        %672 = vmatpush.xpose.msra.mxu0 0.0
        %673 = vmatpush.xpose.msra.mxu0 0.0
        %674 = vmatpush.xpose.msra.mxu0 0.0
        %675 = vmatpush.xpose.msra.mxu0 0.0
        %676 = vmatpush.xpose.msra.mxu0 %v659
        %677 = vmatmul.f32.gmra.mxu0 %v657
        %v678 = vpop.f32.mrf.mxu0
        %v679 = vadd.f32 %v511, %v678
        %680 = vdwg.mxu0
        %v681 = vsel %vm590, %v679, -inf
        %682 = vmax.xlane.f32.xlu0 %v681
        %v683 = vpop.xlane.xlu0 %682
        %v684 = vsub.f32 %v679, %v683
        %v685 = vmul.f32 %v684, 1.442695
        %v686 = vpow.pop %v685
        %v687 = vsel %vm590, %v686, 0.0
        %688 = vadd.xlane.f32.xlu0 %v687
        %v689 = vpop.xlane.xlu0 %688
        %v690 = vrcp.pop %v689
        %v691 = vmul.f32 %v686, %v690
        %692 = vrot.lane.b32.xlu0 %v584, 56
        %v693 = vpop.permute.xlu0 %692
        %v696 = vsel %vm590, %v691, 0
        %698 = vmatpush.msra.mxu0 0.0
        %699 = vmatpush.msra.mxu0 0.0
        %700 = vmatpush.msra.mxu0 0.0
        %701 = vmatpush.msra.mxu0 0.0
        %702 = vmatpush.msra.mxu0 0.0
        %703 = vmatpush.msra.mxu0 0.0
        %704 = vmatpush.msra.mxu0 0.0
        %705 = vmatpush.msra.mxu0 0.0
        %706 = vmatpush.msra.mxu0 0.0
        %707 = vmatpush.msra.mxu0 0.0
        %708 = vmatpush.msra.mxu0 0.0
        %709 = vmatpush.msra.mxu0 0.0
        %710 = vmatpush.msra.mxu0 0.0
        %711 = vmatpush.msra.mxu0 0.0
        %712 = vmatpush.msra.mxu0 0.0
        %713 = vmatpush.msra.mxu0 %v693
        %714 = vmatmul.f32.gmra.mxu0 %v696
        %v715 = vpop.f32.mrf.mxu0
        %v716 = vadd.f32 0.0, %v715
        %717 = vdwg.mxu0
        %718 = vrot.lane.b32.xlu0 %v586, 112
        %v719 = vpop.permute.xlu0 %718
        %720 = vrot.lane.b32.xlu0 %v584, 80
        %v721 = vpop.permute.xlu0 %720
        %v722 = vsel %vm590, %v719, 0
        %v724 = vsel %vm590, %v721, 0
        %726 = vmatpush.xpose.msra.mxu0 0.0
        %727 = vmatpush.xpose.msra.mxu0 0.0
        %728 = vmatpush.xpose.msra.mxu0 0.0
        %729 = vmatpush.xpose.msra.mxu0 0.0
        %730 = vmatpush.xpose.msra.mxu0 0.0
        %731 = vmatpush.xpose.msra.mxu0 0.0
        %732 = vmatpush.xpose.msra.mxu0 0.0
        %733 = vmatpush.xpose.msra.mxu0 0.0
        %734 = vmatpush.xpose.msra.mxu0 0.0
        %735 = vmatpush.xpose.msra.mxu0 0.0
        %736 = vmatpush.xpose.msra.mxu0 0.0
        %737 = vmatpush.xpose.msra.mxu0 0.0
        %738 = vmatpush.xpose.msra.mxu0 0.0
        %739 = vmatpush.xpose.msra.mxu0 0.0
        %740 = vmatpush.xpose.msra.mxu0 0.0
        %741 = vmatpush.xpose.msra.mxu0 %v724
        %742 = vmatmul.f32.gmra.mxu0 %v722
        %v743 = vpop.f32.mrf.mxu0
        %v744 = vadd.f32 %v511, %v743
        %745 = vdwg.mxu0
        %v746 = vsel %vm590, %v744, -inf
        %747 = vmax.xlane.f32.xlu0 %v746
        %v748 = vpop.xlane.xlu0 %747
        %v749 = vsub.f32 %v744, %v748
        %v750 = vmul.f32 %v749, 1.442695
        %v751 = vpow.pop %v750
        %v752 = vsel %vm590, %v751, 0.0
        %753 = vadd.xlane.f32.xlu0 %v752
        %v754 = vpop.xlane.xlu0 %753
        %v755 = vrcp.pop %v754
        %v756 = vmul.f32 %v751, %v755
        %757 = vrot.lane.b32.xlu0 %v584, 48
        %v758 = vpop.permute.xlu0 %757
        %v761 = vsel %vm590, %v756, 0
        %763 = vmatpush.msra.mxu0 0.0
        %764 = vmatpush.msra.mxu0 0.0
        %765 = vmatpush.msra.mxu0 0.0
        %766 = vmatpush.msra.mxu0 0.0
        %767 = vmatpush.msra.mxu0 0.0
        %768 = vmatpush.msra.mxu0 0.0
        %769 = vmatpush.msra.mxu0 0.0
        %770 = vmatpush.msra.mxu0 0.0
        %771 = vmatpush.msra.mxu0 0.0
        %772 = vmatpush.msra.mxu0 0.0
        %773 = vmatpush.msra.mxu0 0.0
        %774 = vmatpush.msra.mxu0 0.0
        %775 = vmatpush.msra.mxu0 0.0
        %776 = vmatpush.msra.mxu0 0.0
        %777 = vmatpush.msra.mxu0 0.0
        %778 = vmatpush.msra.mxu0 %v758
        %779 = vmatmul.f32.gmra.mxu0 %v761
        %v780 = vpop.f32.mrf.mxu0
        %v781 = vadd.f32 0.0, %v780
        %782 = vdwg.mxu0
        %783 = vrot.lane.b32.xlu0 %v586, 104
        %v784 = vpop.permute.xlu0 %783
        %785 = vrot.lane.b32.xlu0 %v584, 72
        %v786 = vpop.permute.xlu0 %785
        %v787 = vsel %vm590, %v784, 0
        %v789 = vsel %vm590, %v786, 0
        %791 = vmatpush.xpose.msra.mxu0 0.0
        %792 = vmatpush.xpose.msra.mxu0 0.0
        %793 = vmatpush.xpose.msra.mxu0 0.0
        %794 = vmatpush.xpose.msra.mxu0 0.0
        %795 = vmatpush.xpose.msra.mxu0 0.0
        %796 = vmatpush.xpose.msra.mxu0 0.0
        %797 = vmatpush.xpose.msra.mxu0 0.0
        %798 = vmatpush.xpose.msra.mxu0 0.0
        %799 = vmatpush.xpose.msra.mxu0 0.0
        %800 = vmatpush.xpose.msra.mxu0 0.0
        %801 = vmatpush.xpose.msra.mxu0 0.0
        %802 = vmatpush.xpose.msra.mxu0 0.0
        %803 = vmatpush.xpose.msra.mxu0 0.0
        %804 = vmatpush.xpose.msra.mxu0 0.0
        %805 = vmatpush.xpose.msra.mxu0 0.0
        %806 = vmatpush.xpose.msra.mxu0 %v789
        %807 = vmatmul.f32.gmra.mxu0 %v787
        %v808 = vpop.f32.mrf.mxu0
        %v809 = vadd.f32 %v511, %v808
        %810 = vdwg.mxu0
        %v811 = vsel %vm590, %v809, -inf
        %812 = vmax.xlane.f32.xlu0 %v811
        %v813 = vpop.xlane.xlu0 %812
        %v814 = vsub.f32 %v809, %v813
        %v815 = vmul.f32 %v814, 1.442695
        %v816 = vpow.pop %v815
        %v817 = vsel %vm590, %v816, 0.0
        %818 = vadd.xlane.f32.xlu0 %v817
        %v819 = vpop.xlane.xlu0 %818
        %v820 = vrcp.pop %v819
        %v821 = vmul.f32 %v816, %v820
        %822 = vrot.lane.b32.xlu0 %v584, 40
        %v823 = vpop.permute.xlu0 %822
        %v826 = vsel %vm590, %v821, 0
        %828 = vmatpush.msra.mxu0 0.0
        %829 = vmatpush.msra.mxu0 0.0
        %830 = vmatpush.msra.mxu0 0.0
        %831 = vmatpush.msra.mxu0 0.0
        %832 = vmatpush.msra.mxu0 0.0
        %833 = vmatpush.msra.mxu0 0.0
        %834 = vmatpush.msra.mxu0 0.0
        %835 = vmatpush.msra.mxu0 0.0
        %836 = vmatpush.msra.mxu0 0.0
        %837 = vmatpush.msra.mxu0 0.0
        %838 = vmatpush.msra.mxu0 0.0
        %839 = vmatpush.msra.mxu0 0.0
        %840 = vmatpush.msra.mxu0 0.0
        %841 = vmatpush.msra.mxu0 0.0
        %842 = vmatpush.msra.mxu0 0.0
        %843 = vmatpush.msra.mxu0 %v823
        %844 = vmatmul.f32.gmra.mxu0 %v826
        %v845 = vpop.f32.mrf.mxu0
        %v846 = vadd.f32 0.0, %v845
        %847 = vdwg.mxu0
        %849 = vrot.lane.b32.xlu0 %v716, 8
        %v850 = vpop.permute.xlu0 %849
        %853 = vrot.lane.b32.xlu0 %v781, 16
        %v854 = vpop.permute.xlu0 %853
        %857 = vrot.lane.b32.xlu0 %v846, 24
        %v858 = vpop.permute.xlu0 %857
        %v860 = vsel %vm590, %v651, %v850
        %vm861 = vcmask 130048
        %v862 = vsel %vm861, %v860, %v854
        %vm863 = vcmask 195584
        %v864 = vsel %vm863, %v862, %v858
        %v865 = vld [vmem:[%s6] sm:$0xff]
        %v866 = vld [vmem:[%s6 + $0x8] sm:$0xff]
        %v867 = vld [vmem:[%s6 + $0x10] sm:$0xff]
        %v868 = vld [vmem:[%s6 + $0x18] sm:$0xff]
        %v869 = vld [vmem:[%s7] sm:$0x1]
        %v871 = vperm.slane %v869, 0
        %v874 = vsel %vm514, %v864, 0
        %876 = vmatpush.msra.mxu0 0.0
        %877 = vmatpush.msra.mxu0 0.0
        %878 = vmatpush.msra.mxu0 0.0
        %879 = vmatpush.msra.mxu0 0.0
        %880 = vmatpush.msra.mxu0 0.0
        %881 = vmatpush.msra.mxu0 0.0
        %882 = vmatpush.msra.mxu0 0.0
        %883 = vmatpush.msra.mxu0 0.0
        %884 = vmatpush.msra.mxu0 0.0
        %885 = vmatpush.msra.mxu0 0.0
        %886 = vmatpush.msra.mxu0 0.0
        %887 = vmatpush.msra.mxu0 0.0
        %888 = vmatpush.msra.mxu0 %v868
        %889 = vmatpush.msra.mxu0 %v867
        %890 = vmatpush.msra.mxu0 %v866
        %891 = vmatpush.msra.mxu0 %v865
        %892 = vmatmul.f32.gmra.mxu0 %v874
        %v893 = vpop.f32.mrf.mxu0
        %v894 = vadd.f32 %v871, %v893
        %895 = vdwg.mxu0
        %v896 = vadd.f32 %v510, %v894
        %v897 = vld [vmem:[%s8] sm:$0x1]
        %v898 = vld [vmem:[%s9] sm:$0x1]
        %v899 = vsel %vm514, %v896, 0.0
        %900 = vadd.xlane.f32.xlu0 %v899
        %v901 = vpop.xlane.xlu0 %900
        %v902 = vmul.f32 %v901, %v524
        %v903 = vsub.f32 %v896, %v902
        %v904 = vmul.f32 %v903, %v903
        %v905 = vsel %vm514, %v904, 0.0
        %906 = vadd.xlane.f32.xlu0 %v905
        %v907 = vpop.xlane.xlu0 %906
        %v908 = vmul.f32 %v907, 0.032258064
        %v909 = vrsqrt.pop %v908
        %v910 = vmul.f32 %v909, %v908
        %v911 = vmul.f32 %v910, %v909
        %v912 = vmul.f32 0.5, %v911
        %v913 = vsub.f32 1.5, %v912
        %v914 = vmul.f32 %v909, %v913
        %v915 = vmul.f32 %v908, %v914
        %vm916 = vcmp.eq.f32.partialorder %v908, inf
        %v917 = vsel %vm916, %v908, %v915
        %vm918 = vcmp.eq.f32.partialorder %v908, 0.0
        %v919 = vand.u32 %v908, 2147483648
        %v920 = vsel %vm918, %v919, %v917
        %v922 = vperm.slane %v897, 0
        %v924 = vmul.f32 %v922, %v903
        %v925 = vadd.f32 %v920, 1e-06
        %v926 = vrcp.pop %v925
        %v927 = vmul.f32 %v924, %v926
        %v929 = vperm.slane %v898, 0
        %v931 = vadd.f32 %v927, %v929
        %v932 = vld [vmem:[%s10] sm:$0xff]
        %v933 = vld [vmem:[%s10 + $0x8] sm:$0xff]
        %v934 = vld [vmem:[%s10 + $0x10] sm:$0xff]
        %v935 = vld [vmem:[%s10 + $0x18] sm:$0xff]
        %v936 = vld [vmem:[#allocation2] sm:$0x1]
        %v938 = vperm.slane %v936, 0
        %v941 = vsel %vm514, %v931, 0
        %943 = vmatpush.msra.mxu0 0.0
        %944 = vmatpush.msra.mxu0 0.0
        %945 = vmatpush.msra.mxu0 0.0
        %946 = vmatpush.msra.mxu0 0.0
        %947 = vmatpush.msra.mxu0 0.0
        %948 = vmatpush.msra.mxu0 0.0
        %949 = vmatpush.msra.mxu0 0.0
        %950 = vmatpush.msra.mxu0 0.0
        %951 = vmatpush.msra.mxu0 0.0
        %952 = vmatpush.msra.mxu0 0.0
        %953 = vmatpush.msra.mxu0 0.0
        %954 = vmatpush.msra.mxu0 0.0
        %955 = vmatpush.msra.mxu0 %v935
        %956 = vmatpush.msra.mxu0 %v934
        %957 = vmatpush.msra.mxu0 %v933
        %958 = vmatpush.msra.mxu0 %v932
        %959 = vmatmul.f32.gmra.mxu0 %v941
        %v960 = vpop.f32.mrf.mxu0
        %v961 = vadd.f32 %v938, %v960
        %962 = vdwg.mxu0
        %v963 = vmax.f32 %v961, 0.0
        %v964 = vld [vmem:[%s12] sm:$0xff]
        %v965 = vld [vmem:[%s12 + $0x8] sm:$0xff]
        %v966 = vld [vmem:[%s12 + $0x10] sm:$0xff]
        %v967 = vld [vmem:[%s12 + $0x18] sm:$0xff]
        %v968 = vld [vmem:[%s12 + $0x20] sm:$0xff]
        %v969 = vld [vmem:[%s12 + $0x28] sm:$0xff]
        %v970 = vld [vmem:[%s12 + $0x30] sm:$0xff]
        %v971 = vld [vmem:[%s12 + $0x38] sm:$0xff]
        %v972 = vld [vmem:[#allocation5] sm:$0x1]
        %v974 = vperm.slane %v972, 0
        %vm976 = vcmask 523264
        %v978 = vsel %vm976, %v963, 0
        %980 = vmatpush.msra.mxu0 0.0
        %981 = vmatpush.msra.mxu0 0.0
        %982 = vmatpush.msra.mxu0 0.0
        %983 = vmatpush.msra.mxu0 0.0
        %984 = vmatpush.msra.mxu0 0.0
        %985 = vmatpush.msra.mxu0 0.0
        %986 = vmatpush.msra.mxu0 0.0
        %987 = vmatpush.msra.mxu0 0.0
        %988 = vmatpush.msra.mxu0 %v971
        %989 = vmatpush.msra.mxu0 %v970
        %990 = vmatpush.msra.mxu0 %v969
        %991 = vmatpush.msra.mxu0 %v968
        %992 = vmatpush.msra.mxu0 %v967
        %993 = vmatpush.msra.mxu0 %v966
        %994 = vmatpush.msra.mxu0 %v965
        %995 = vmatpush.msra.mxu0 %v964
        %996 = vmatmul.f32.gmra.mxu0 %v978
        %v997 = vpop.f32.mrf.mxu0
        %v998 = vadd.f32 %v974, %v997
        %999 = vdwg.mxu0
        %v1000 = vadd.f32 %v896, %v998
        %1001 = vst.msk [vmem:[%s501] sm:$0xff] %vm514, %v1000
        %s1002 = sand.u32 %s342, 1
        %s1003 = scalar_lea.sflag [#allocation4], %s1002
        %s1004 = sand.u32 %s342, 1
        %s1005 = smul.addr %s1004, 8
        %s1006 = scalar_lea.vmem [#allocation7], %s1005
        // Predicated region
        $region85: #{encoder_layer_forward.1} parent=75 // pred_check
          %p1007 = pneg %p352
        $region86: #{encoder_layer_forward.1} parent=75 // pred_check_branch
          %1009 = sbr.rel (%p1007) target = $region88
        $region87: #{encoder_layer_forward.1} parent=75 // pred_region
          %1011 = vsyncadd %s1003, 0
          %s1012 = smul.addr %s30, 8
          %s1013 = scalar_lea.hbm %s14, %s1012
          %s1015 = sshll.u32 %s1006, 4
          %s1016 = int_to_ptr.vmem [resolvable:$true] %s1015
          %s1017 = sshll.u32 %s1013, 4
          %s1018 = int_to_ptr.hbm [resolvable:$true] %s1017
          %1020 = dma.vmem_to_hbm [thread:$0]  %s1016, 128, %s1018, %s1003
        $region88: #{encoder_layer_forward.1} parent=75 // pred_fallthru
          _
      $region76: #{encoder_layer_forward.1} parent=5 // pred_fallthru
        _
      %p1021 = scmp.le.s32.totalorder 2, %s25
      // Predicated region
      $region89: #{encoder_layer_forward.1} parent=5 // pred_check
        %p1022 = pneg %p1021
      $region90: #{encoder_layer_forward.1} parent=5 // pred_check_branch
        %1024 = sbr.rel (%p1022) target = $region92
      $region91: #{encoder_layer_forward.1} parent=5 // pred_region
        %s1025 = ssub.s32 %s25, 2
        // Predicated region
        $region93: #{encoder_layer_forward.1} parent=91 // pred_check
          %p1026 = pneg %p358
        $region94: #{encoder_layer_forward.1} parent=91 // pred_check_branch
          %1028 = sbr.rel (%p1026) target = $region96
        $region95: #{encoder_layer_forward.1} parent=91 // pred_region
          %s1029 = sand.u32 %s343, 1
          %s1030 = scalar_lea.sflag [#allocation4], %s1029
          %s1031 = sand.u32 %s343, 1
          %s1032 = smul.addr %s1031, 8
          %s1033 = scalar_lea.vmem [#allocation7], %s1032
          %1035 = dma.done %s1030, 128
        $region96: #{encoder_layer_forward.1} parent=91 // pred_fallthru
          _
      $region92: #{encoder_layer_forward.1} parent=5 // pred_fallthru
        _
    $region6: #{encoder_layer_forward.1} parent=1 // loop_footer
      %s29 = sadd.s32 1, %s25
    $region7: #{encoder_layer_forward.1} parent=1 // loop_footer_branch
      %24 = sbr.rel target = $region3
    $region8: #{encoder_layer_forward.1} parent=1 // loop_exit
      _
    %1036 = vsyncpa [#allocation3], 1
    %s1037 = scalar_lea.sflag [#allocation3], 1
    %1038 = vsyncpa %s1037, 1
    %1039 = vsyncpa [#allocation6], 1
    %1040 = vsyncpa [#allocation4], 1
    %s1041 = scalar_lea.sflag [#allocation4], 1
    %1042 = vsyncpa %s1041, 1

</llo_original>
